<compile_context>
chip_gen: v7x
topology: tpu7x:2x2x1
jax: 0.10.0
libtpu: 0.0.40
codegen_flags: <defaults>
</compile_context>

<pallas_src>
import jax
import jax.numpy as jnp
from jax.experimental import pallas as pl
from jax.experimental.pallas import tpu as pltpu


def _prod(dims):
    p = 1
    for d in dims:
        p *= int(d)
    return p


def _hbm_copy_kernel(x_ref, o_ref, sem):
    # Single whole-buffer HBM->HBM DMA; the DMA engine runs it at HBM
    # bandwidth while the TensorCore stays free.
    cp = pltpu.make_async_copy(x_ref, o_ref, sem)
    cp.start()
    cp.wait()


def pallas_reshape(x, shape, *, force_copy=False):
    """Equivalent of torch: x.reshape(x.shape[0], *shape).

    Default: metadata-only reshape (zero data movement).
    force_copy=True: materialize a fresh buffer via a direct HBM->HBM DMA.
    """
    B = int(x.shape[0])
    F = _prod(x.shape[1:])
    F_target = _prod(shape)
    assert F == F_target, f"cannot reshape {x.shape} -> ({B}, {tuple(shape)})"

    out_shape = (B, *tuple(int(d) for d in shape))

    # Metadata-only re-view (always exact, always free).
    x_view = jnp.reshape(x, out_shape)
    if not force_copy:
        return x_view

    nbytes = _prod(out_shape) * jnp.dtype(x.dtype).itemsize
    if nbytes == 0:
        # Nothing to copy; the view is already the answer.
        return x_view

    return pl.pallas_call(
        _hbm_copy_kernel,
        out_shape=jax.ShapeDtypeStruct(out_shape, x.dtype),
        in_specs=[pl.BlockSpec(memory_space=pl.ANY)],
        out_specs=pl.BlockSpec(memory_space=pl.ANY),
        scratch_shapes=[pltpu.SemaphoreType.DMA(())],
        compiler_params=pltpu.CompilerParams(has_side_effects=True),
        cost_estimate=pl.CostEstimate(
            flops=0,
            transcendentals=0,
            bytes_accessed=2 * nbytes,
        ),
    )(x_view)


if __name__ == "__main__":
    key = jax.random.PRNGKey(0)
    k1, k2, k3 = jax.random.split(key, 3)

    # Case 1: canonical small input (B=2, C=4, H=16, W=16) -> (16, 8, 8).
    # Default path: metadata-only reshape, zero data movement.
    x1 = jax.random.normal(k1, (2, 4, 16, 16), dtype=jnp.float32)
    tgt1 = (16, 8, 8)
    out1 = jax.block_until_ready(pallas_reshape(x1, tgt1))
    ref1 = x1.reshape(2, *tgt1)
    assert out1.shape == (2, 16, 8, 8), out1.shape
    assert out1.dtype == x1.dtype
    assert jnp.array_equal(out1, ref1), "mismatch vs reference reshape (bypass)"

    # Case 2: force the Pallas copy path (direct HBM->HBM DMA) on the same
    # small input.
    out2 = jax.block_until_ready(pallas_reshape(x1, tgt1, force_copy=True))
    assert out2.shape == (2, 16, 8, 8)
    assert jnp.array_equal(out2, ref1), "mismatch vs reference reshape (DMA copy)"

    # Case 3: a larger f32 buffer through the DMA copy path.
    x2 = jax.random.normal(k2, (4, 8, 32, 32), dtype=jnp.float32)
    tgt2 = (32, 256)
    out3 = jax.block_until_ready(pallas_reshape(x2, tgt2, force_copy=True))
    ref2 = x2.reshape(4, *tgt2)
    assert out3.shape == (4, 32, 256), out3.shape
    assert jnp.array_equal(out3, ref2), "mismatch vs reference reshape (DMA, larger)"

    # Case 4: bfloat16 with an odd trailing size — DMA path has no tiling or
    # sublane-packing constraints, so sub-32-bit dtypes need no special casing.
    x3 = jax.random.normal(k3, (2, 3, 5, 7), dtype=jnp.bfloat16)
    tgt3 = (105,)
    out4 = jax.block_until_ready(pallas_reshape(x3, tgt3, force_copy=True))
    ref3 = x3.reshape(2, *tgt3)
    assert out4.shape == (2, 105), out4.shape
    assert out4.dtype == jnp.bfloat16
    assert jnp.array_equal(out4, ref3), "mismatch vs reference reshape (bf16 DMA)"

    print("KERNEL_OK")
</pallas_src>

<mosaic_0001>
module attributes {stable_mosaic.version = 11 : i64} {
  func.func @_hbm_copy_kernel(%arg0: memref<2x16x8x8xf32, #tpu.memory_space<any>>, %arg1: memref<2x16x8x8xf32, #tpu.memory_space<any>>, %arg2: memref<!tpu.dma_semaphore, #tpu.memory_space<semaphore_mem>>) attributes {dimension_semantics = [], scalar_prefetch = 0 : i64, scratch_operands = 1 : i64, tpu.core_type = #tpu.core_type<tc>} {
    tpu.enqueue_dma source(%arg0 : memref<2x16x8x8xf32, #tpu.memory_space<any>>) target(%arg1 : memref<2x16x8x8xf32, #tpu.memory_space<any>>) target_semaphore(%arg2 : memref<!tpu.dma_semaphore, #tpu.memory_space<semaphore_mem>>)
    tpu.wait_dma2 semaphore(%arg2 : memref<!tpu.dma_semaphore, #tpu.memory_space<semaphore_mem>>) src(%arg0 : memref<2x16x8x8xf32, #tpu.memory_space<any>>) dst(%arg1 : memref<2x16x8x8xf32, #tpu.memory_space<any>>)
    return
  }
}

</mosaic_0001>

<llo_original>
// kernel: tpu_custom_call.1
$region0: #{tpu_custom_call.1}
  #allocation0 [shape = 'u32[]', space=smem, size = 0x4, offset = 0x4, fixed_abs, tag = 'smem constant byte address 0x4 - core index']
  #allocation1 [shape = 'u32[144,128]{1,0:T(1,128)}', space=vmem, size = 0x12000, scoped, tag = 'internal scratch']
  #allocation2 [shape = 's32[1]{0}', space=sflag, size = 0x4, scoped, tag = 'scratch operand']
  #allocation3 [shape = 's32[]', space=sflag, size = 0x4, offset = 0, fixed_abs, tag = 'sflag constant byte address 0x0 - dummy sync flag']
  %s0 = inlined_call_operand.vmem [shape: f32[2,16,8,8], index: 0, kind: input, shape index: {}]
  %s1 = inlined_call_operand.vmem [shape: f32[2,16,8,8], index: 1, kind: output, shape index: {}]
  %s2 = sld [smem:[#allocation0]]
  $region36: #{tpu_custom_call.1} parent=0
    _
  %s4 = ssub.s32 1, %s2
  %s5 = scalar_select 0, %s4, %s2
  %p7 = scmp.lt.u32.totalorder 256, 8
  %p8 = pneg %p7
  // Predicated region
  $region2: #{tpu_custom_call.1} parent=0 // pred_check
    _
  $region3: #{tpu_custom_call.1} parent=0 // pred_check_branch
    %10 = sbr.rel (%p7) target = $region5
  $region4: #{tpu_custom_call.1} parent=0 // pred_region
    %s25 = sand.u32 256, 7
    %p26 = scmp.eq.s32.totalorder %s25, 0
    // Predicated region
    $region17: #{tpu_custom_call.1} parent=4 // pred_check
      %p27 = pneg %p26
    $region18: #{tpu_custom_call.1} parent=4 // pred_check_branch
      %29 = sbr.rel (%p27) target = $region20
    $region19: #{tpu_custom_call.1} parent=4 // pred_region
      loop: start=0, step=1, limit=1
      $region21: #{tpu_custom_call.1} parent=19 // loop_pre_header
        _
      $region22: #{tpu_custom_call.1} parent=19 // loop_header
        %s31 = sphi 0, %s35
        %p32 = scmp.ge.s32.totalorder %s31, 1
        %s36 = sphi %s0, %s0
        %s37 = sphi %s1, %s1
      $region23: #{tpu_custom_call.1} parent=19 // loop_header_branch
        %34 = sbr.rel (%p32) target = $region27
      $region24: #{tpu_custom_call.1} parent=19 // loop_body
        %v38 = vld [vmem:[%s36] sm:$0xff]
        %39 = vst [vmem:[%s37] sm:$0xff] %v38
        %v40 = vld [vmem:[%s36 + $0x8] sm:$0xff]
        %41 = vst [vmem:[%s37 + $0x8] sm:$0xff] %v40
        %v42 = vld [vmem:[%s36 + $0x10] sm:$0xff]
        %43 = vst [vmem:[%s37 + $0x10] sm:$0xff] %v42
        %v44 = vld [vmem:[%s36 + $0x18] sm:$0xff]
        %45 = vst [vmem:[%s37 + $0x18] sm:$0xff] %v44
        %v46 = vld [vmem:[%s36 + $0x20] sm:$0xff]
        %47 = vst [vmem:[%s37 + $0x20] sm:$0xff] %v46
        %v48 = vld [vmem:[%s36 + $0x28] sm:$0xff]
        %49 = vst [vmem:[%s37 + $0x28] sm:$0xff] %v48
        %v50 = vld [vmem:[%s36 + $0x30] sm:$0xff]
        %51 = vst [vmem:[%s37 + $0x30] sm:$0xff] %v50
        %v52 = vld [vmem:[%s36 + $0x38] sm:$0xff]
        %53 = vst [vmem:[%s37 + $0x38] sm:$0xff] %v52
        %v54 = vld [vmem:[%s36 + $0x40] sm:$0xff]
        %55 = vst [vmem:[%s37 + $0x40] sm:$0xff] %v54
        %v56 = vld [vmem:[%s36 + $0x48] sm:$0xff]
        %57 = vst [vmem:[%s37 + $0x48] sm:$0xff] %v56
        %v58 = vld [vmem:[%s36 + $0x50] sm:$0xff]
        %59 = vst [vmem:[%s37 + $0x50] sm:$0xff] %v58
        %v60 = vld [vmem:[%s36 + $0x58] sm:$0xff]
        %61 = vst [vmem:[%s37 + $0x58] sm:$0xff] %v60
        %v62 = vld [vmem:[%s36 + $0x60] sm:$0xff]
        %63 = vst [vmem:[%s37 + $0x60] sm:$0xff] %v62
        %v64 = vld [vmem:[%s36 + $0x68] sm:$0xff]
        %65 = vst [vmem:[%s37 + $0x68] sm:$0xff] %v64
        %v66 = vld [vmem:[%s36 + $0x70] sm:$0xff]
        %67 = vst [vmem:[%s37 + $0x70] sm:$0xff] %v66
        %v68 = vld [vmem:[%s36 + $0x78] sm:$0xff]
        %69 = vst [vmem:[%s37 + $0x78] sm:$0xff] %v68
        %v70 = vld [vmem:[%s36 + $0x80] sm:$0xff]
        %71 = vst [vmem:[%s37 + $0x80] sm:$0xff] %v70
        %v72 = vld [vmem:[%s36 + $0x88] sm:$0xff]
        %73 = vst [vmem:[%s37 + $0x88] sm:$0xff] %v72
        %v74 = vld [vmem:[%s36 + $0x90] sm:$0xff]
        %75 = vst [vmem:[%s37 + $0x90] sm:$0xff] %v74
        %v76 = vld [vmem:[%s36 + $0x98] sm:$0xff]
        %77 = vst [vmem:[%s37 + $0x98] sm:$0xff] %v76
        %v78 = vld [vmem:[%s36 + $0xa0] sm:$0xff]
        %79 = vst [vmem:[%s37 + $0xa0] sm:$0xff] %v78
        %v80 = vld [vmem:[%s36 + $0xa8] sm:$0xff]
        %81 = vst [vmem:[%s37 + $0xa8] sm:$0xff] %v80
        %v82 = vld [vmem:[%s36 + $0xb0] sm:$0xff]
        %83 = vst [vmem:[%s37 + $0xb0] sm:$0xff] %v82
        %v84 = vld [vmem:[%s36 + $0xb8] sm:$0xff]
        %85 = vst [vmem:[%s37 + $0xb8] sm:$0xff] %v84
        %v86 = vld [vmem:[%s36 + $0xc0] sm:$0xff]
        %87 = vst [vmem:[%s37 + $0xc0] sm:$0xff] %v86
        %v88 = vld [vmem:[%s36 + $0xc8] sm:$0xff]
        %89 = vst [vmem:[%s37 + $0xc8] sm:$0xff] %v88
        %v90 = vld [vmem:[%s36 + $0xd0] sm:$0xff]
        %91 = vst [vmem:[%s37 + $0xd0] sm:$0xff] %v90
        %v92 = vld [vmem:[%s36 + $0xd8] sm:$0xff]
        %93 = vst [vmem:[%s37 + $0xd8] sm:$0xff] %v92
        %v94 = vld [vmem:[%s36 + $0xe0] sm:$0xff]
        %95 = vst [vmem:[%s37 + $0xe0] sm:$0xff] %v94
        %v96 = vld [vmem:[%s36 + $0xe8] sm:$0xff]
        %97 = vst [vmem:[%s37 + $0xe8] sm:$0xff] %v96
        %v98 = vld [vmem:[%s36 + $0xf0] sm:$0xff]
        %99 = vst [vmem:[%s37 + $0xf0] sm:$0xff] %v98
        %v100 = vld [vmem:[%s36 + $0xf8] sm:$0xff]
        %101 = vst [vmem:[%s37 + $0xf8] sm:$0xff] %v100
      $region25: #{tpu_custom_call.1} parent=19 // loop_footer
        %s35 = sadd.s32 1, %s31
      $region26: #{tpu_custom_call.1} parent=19 // loop_footer_branch
        %30 = sbr.rel target = $region22
      $region27: #{tpu_custom_call.1} parent=19 // loop_exit
        _
    $region20: #{tpu_custom_call.1} parent=4 // pred_fallthru
      _
    %p102 = pneg %p26
    // Predicated region
    $region28: #{tpu_custom_call.1} parent=4 // pred_check
      _
    $region29: #{tpu_custom_call.1} parent=4 // pred_check_branch
      %104 = sbr.rel (%p26) target = $region31
    $region30: #{tpu_custom_call.1} parent=4 // pred_region
      %s105 = sand.u32 256, 7
    $region31: #{tpu_custom_call.1} parent=4 // pred_fallthru
      _
  $region5: #{tpu_custom_call.1} parent=0 // pred_fallthru
    _
  // Predicated region
  $region6: #{tpu_custom_call.1} parent=0 // pred_check
    %p11 = pneg %p7
  $region7: #{tpu_custom_call.1} parent=0 // pred_check_branch
    %13 = sbr.rel (%p11) target = $region9
  $region8: #{tpu_custom_call.1} parent=0 // pred_region
    %s14 = sshllo.u32 0, 256
    loop: start=0, step=1, limit=1
    $region10: #{tpu_custom_call.1} parent=8 // loop_pre_header
      _
    $region11: #{tpu_custom_call.1} parent=8 // loop_header
      %s16 = sphi 0, %s20
      %p17 = scmp.ge.s32.totalorder %s16, 1
      %s21 = sphi %s0, %s0
      %s22 = sphi %s1, %s1
    $region12: #{tpu_custom_call.1} parent=8 // loop_header_branch
      %19 = sbr.rel (%p17) target = $region16
    $region13: #{tpu_custom_call.1} parent=8 // loop_body
      %v23 = vld [vmem:[%s21] sm:%s14]
      %24 = vst [vmem:[%s22] sm:%s14] %v23
    $region14: #{tpu_custom_call.1} parent=8 // loop_footer
      %s20 = sadd.s32 1, %s16
    $region15: #{tpu_custom_call.1} parent=8 // loop_footer_branch
      %15 = sbr.rel target = $region11
    $region16: #{tpu_custom_call.1} parent=8 // loop_exit
      _
  $region9: #{tpu_custom_call.1} parent=0 // pred_fallthru
    _
  // Predicated region
  $region32: #{tpu_custom_call.1} parent=0 // pred_check
    _
  $region33: #{tpu_custom_call.1} parent=0 // pred_check_branch
    %108 = sbr.rel (0) target = $region35
  $region34: #{tpu_custom_call.1} parent=0 // pred_region
    %109 = vsyncadd [#allocation2], 4096
  $region35: #{tpu_custom_call.1} parent=0 // pred_fallthru
    _
  %s110 = smul.u32 2, 16
  %s111 = smul.u32 %s110, 8
  %s112 = smul.u32 %s111, 1
  %s113 = sshll.u32 %s112, 4
  %114 = dma.done [#allocation2], %s113
  %115 = vsyncmov [#allocation2]
  %s116 = vpop.sfrf %115
  %p117 = scmp.eq.s32.totalorder %s116, 0
  %p118 = pneg %p117
  %120 = shalt.err (%p118)

</llo_original>
